<compile_context>
chip_gen: v6e
topology: v6e:2x2x1
jax: 0.10.0
libtpu: 0.0.40
codegen_flags: <defaults>
</compile_context>

<pallas_src>
from functools import partial

import numpy as np
import jax
import jax.numpy as jnp
from jax import lax
from jax.experimental import pallas as pl
from jax.experimental.pallas import tpu as pltpu


# -----------------------------------------------------------------------------
# Kernel 1: masked mean pooling over the sequence axis.
#   grid = (B, S // S_TILE); B is "parallel" (shards across v7x's 2 TCs),
#   the S reduction axis is "arbitrary" and last in the grid.
# -----------------------------------------------------------------------------
def mean_pool_kernel(emb_ref, mask_ref, out_ref, acc_ref, msum_ref):
    s = pl.program_id(1)

    @pl.when(s == 0)
    def _init():
        acc_ref[...] = jnp.zeros_like(acc_ref)
        msum_ref[...] = jnp.zeros_like(msum_ref)

    emb = emb_ref[0]                       # (S_TILE, H), stored dtype (bf16/f32)
    mask = mask_ref[0]                     # (1, S_TILE), f32

    # masked sum of this tile via the MXU: (1,S_TILE) @ (S_TILE,H) -> (1,H) f32.
    acc_ref[...] += lax.dot_general(
        mask.astype(emb.dtype), emb,
        dimension_numbers=(((1,), (0,)), ((), ())),
        preferred_element_type=jnp.float32)

    # running mask sum (denominator), accumulated in f32.
    msum_ref[...] += jnp.sum(mask, axis=1, keepdims=True).astype(jnp.float32)

    @pl.when(s == pl.num_programs(1) - 1)
    def _finalize():
        denom = jnp.maximum(msum_ref[...], 1e-9)          # clamp(min=1e-9)
        out_ref[...] = (acc_ref[...] / denom)[None].astype(out_ref.dtype)


def _pick_s_tile(S, H, itemsize, budget_bytes=4 * 1024 * 1024):
    """Largest seq tile dividing S whose [1, S_TILE, H] block fits ~4 MiB.

    4 MiB per block keeps (2 double-buffered inputs + mask + scratch) well
    under the 16 MiB scoped-VMEM default on v5e and under half of v7x's
    64 MiB physical VMEM; at H=4096 bf16 this yields S_TILE=512 (the measured
    >=512 roofline sweet spot).
    """
    if S * H * itemsize <= budget_bytes:
        return S
    tile = max((budget_bytes // (H * itemsize)) // 8 * 8, 8)
    while tile > 8 and S % tile != 0:
        tile -= 8
    return tile if S % tile == 0 else S


def mean_pooling(token_embeddings, attention_mask):
    B, S, H = token_embeddings.shape
    s_tile = _pick_s_tile(S, H, token_embeddings.dtype.itemsize)
    # mask as [B, 1, S] so its block (1, 1, S_TILE) keeps S on the lane axis.
    mask3 = attention_mask.astype(jnp.float32).reshape(B, 1, S)

    out = pl.pallas_call(
        mean_pool_kernel,
        out_shape=jax.ShapeDtypeStruct((B, 1, H), jnp.float32),
        grid_spec=pltpu.PrefetchScalarGridSpec(
            num_scalar_prefetch=0,
            grid=(B, S // s_tile),
            in_specs=[
                pl.BlockSpec((1, s_tile, H), lambda b, s: (b, s, 0)),
                pl.BlockSpec((1, 1, s_tile), lambda b, s: (b, 0, s)),
            ],
            out_specs=pl.BlockSpec((1, 1, H), lambda b, s: (b, 0, 0)),
            scratch_shapes=[
                pltpu.VMEM((1, H), jnp.float32),   # masked-sum accumulator
                pltpu.VMEM((1, 1), jnp.float32),   # mask-sum accumulator
            ],
        ),
        compiler_params=pltpu.CompilerParams(
            dimension_semantics=("parallel", "arbitrary")),
    )(token_embeddings, mask3)
    return out.reshape(B, H)


# -----------------------------------------------------------------------------
# Kernel 2: cosine similarity + jaccard blend + max/argmax + reward direction.
#   Takes the full pooled [B, H] tensor; the gen/answer split happens inside
#   the kernel, avoiding XLA slice copies and an extra HBM round trip.
# -----------------------------------------------------------------------------
def make_reward_kernel(num_gen, w_cos, w_jac):
    G = int(num_gen)
    w_cos = float(w_cos)
    w_jac = float(w_jac)

    def reward_kernel(emb_ref, jac_ref, dir_ref, out_ref):
        emb = emb_ref[...].astype(jnp.float32)    # (B, H); f32 for stable norms
        gen = emb[:G]                             # (G, H)
        ans = emb[G:]                             # (E, H)
        jac = jac_ref[...]                        # (G, E)
        direction = dir_ref[...]                  # (1, E) (+1 gold / -1 bad)

        eps = 1e-8
        # <g, a> contracting over H directly (no in-kernel transpose of ans).
        dots = lax.dot_general(gen, ans,
                               dimension_numbers=(((1,), (1,)), ((), ())),
                               preferred_element_type=jnp.float32)   # (G, E)
        g2 = jnp.sum(gen * gen, axis=-1, keepdims=True)              # (G, 1)
        a2 = jnp.sum(ans * ans, axis=-1, keepdims=True)              # (E, 1)
        # outer product of squared norms via MXU (still no transpose).
        n2 = lax.dot_general(g2, a2,
                             dimension_numbers=(((1,), (1,)), ((), ())),
                             preferred_element_type=jnp.float32)     # (G, E)
        # cos = <g,a> / max(||g||*||a||, eps) == <g,a> * rsqrt(max(g2*a2, eps^2))
        cos = dots * lax.rsqrt(jnp.maximum(n2, eps * eps))
        cos = jnp.maximum(cos, 0.0)               # coses[coses < 0] = 0

        sim = w_cos * cos + w_jac * jac           # (G, E)

        value = jnp.max(sim, axis=-1, keepdims=True)                 # (G, 1)
        E = sim.shape[1]
        iota = lax.broadcasted_iota(jnp.int32, sim.shape, 1)         # (G, E)
        # first index attaining the max (matches torch.max tie-breaking)
        idx = jnp.min(jnp.where(sim == value, iota, E), axis=-1, keepdims=True)
        dir_sel = jnp.sum(jnp.where(iota == idx, direction, 0.0),
                          axis=-1, keepdims=True)                    # (G, 1)
        out_ref[...] = value * dir_sel

    return reward_kernel


def reward_head(sentence_embeddings, jaccards, reward_direction, num_gen,
                weights):
    kernel = make_reward_kernel(num_gen, weights[0], weights[1])
    out = pl.pallas_call(
        kernel,
        out_shape=jax.ShapeDtypeStruct((num_gen, 1), jnp.float32),
        in_specs=[
            pl.BlockSpec(memory_space=pltpu.MemorySpace.VMEM),
            pl.BlockSpec(memory_space=pltpu.MemorySpace.VMEM),
            pl.BlockSpec(memory_space=pltpu.MemorySpace.VMEM),
        ],
        out_specs=pl.BlockSpec(memory_space=pltpu.MemorySpace.VMEM),
    )(sentence_embeddings, jaccards, reward_direction.reshape(1, -1))
    return out[:, 0]


# -----------------------------------------------------------------------------
# Host-side glue (tokenizer / backbone / jaccard are not tensor compute).
# -----------------------------------------------------------------------------
def jaccard(s1, s2):
    # TODO(synk): set-intersection over ragged Python token-id lists has no
    # Pallas equivalent; computed on host exactly as in the PyTorch module.
    assert len(s1) + len(s2) > 0
    s1, s2 = set(s1), set(s2)
    return len(s1 & s2) / len(s1 | s2)


def reward_model_forward(token_embeddings, attention_mask, token_ids,
                         num_gen, num_gold, num_bad,
                         weight_for_cos_and_jaccard=(0.5, 0.5)):
    """token_embeddings: [B, S, H] for sentences = gen_texts + gold + bad."""
    example_num = num_gold + num_bad
    # reward_direction: +1 for gold answers, -1 for bad answers
    reward_direction = np.ones((example_num,), dtype=np.float32)
    reward_direction[num_gold:] = -1.0
    reward_direction = jnp.asarray(reward_direction)

    # Pallas kernel 1: masked mean pooling (dispatched asynchronously; the
    # host-side jaccard loop below overlaps with the device pooling kernel).
    sentence_embeddings = mean_pooling(token_embeddings, attention_mask)

    # Host jaccard matrix [num_gen, example_num] (runs while the TPU pools).
    example_ids = token_ids[-example_num:]
    jac = np.zeros((num_gen, example_num), dtype=np.float32)
    for i in range(num_gen):
        j_fn = partial(jaccard, token_ids[i])
        jac[i, :] = [j_fn(e) for e in example_ids]
    jac = jnp.asarray(jac)

    # Pallas kernel 2: cosine + blend + max + direction (split done in-kernel).
    return reward_head(sentence_embeddings, jac, reward_direction,
                       num_gen, weight_for_cos_and_jaccard)


if __name__ == "__main__":
    # Synthetic setup consistent with the module's defaults:
    #   gen_texts: 2, gold_answers: 2, bad_answers: 2  -> 6 sentences total
    num_gen, num_gold, num_bad = 2, 2, 2
    B = num_gen + num_gold + num_bad     # 6 sentences
    S = 8                                # max padded sequence length
    H = 32                               # hidden size of the (synthetic) encoder

    key = jax.random.PRNGKey(0)
    k_emb, k_len = jax.random.split(key)

    # Synthetic backbone output (stand-in for ChatGLM token embeddings).
    token_embeddings = jax.random.normal(k_emb, (B, S, H), dtype=jnp.float32)

    # Deterministic sentence lengths -> attention mask [B, S]
    lengths = np.array([8, 6, 5, 7, 4, 8], dtype=np.int32)
    attention_mask = (np.arange(S)[None, :] < lengths[:, None]).astype(np.float32)
    attention_mask = jnp.asarray(attention_mask)

    # Deterministic token-id lists (stand-in for tokenizer output, no specials)
    rng = np.random.RandomState(0)
    token_ids = [list(rng.randint(0, 20, size=int(L))) for L in lengths]

    reward = reward_model_forward(
        token_embeddings, attention_mask, token_ids,
        num_gen=num_gen, num_gold=num_gold, num_bad=num_bad,
        weight_for_cos_and_jaccard=(0.5, 0.5),
    )
    reward = jax.block_until_ready(reward)
    assert reward.shape == (num_gen,)
    print("KERNEL_OK")
</pallas_src>

<mosaic_0001>
module attributes {stable_mosaic.version = 11 : i64} {
  func.func @mean_pool_kernel(%arg0: i32, %arg1: i32, %arg2: memref<1x8x32xf32, #tpu.memory_space<vmem>>, %arg3: memref<1x1x8xf32, #tpu.memory_space<vmem>>, %arg4: memref<1x1x32xf32, #tpu.memory_space<vmem>>, %arg5: memref<1x32xf32, #tpu.memory_space<vmem>>, %arg6: memref<1x1xf32, #tpu.memory_space<vmem>>) attributes {dimension_semantics = [#tpu.dimension_semantics<parallel>, #tpu.dimension_semantics<arbitrary>], iteration_bounds = array<i64: 6, 1>, scalar_prefetch = 0 : i64, scratch_operands = 2 : i64, tpu.core_type = #tpu.core_type<tc>, window_params = [{transform_indices = @transform_0, window_bounds = array<i64: 1, 8, 32>}, {transform_indices = @transform_1, window_bounds = array<i64: 1, 1, 8>}, {transform_indices = @transform_2, window_bounds = array<i64: 1, 1, 32>}]} {
    %c0_i32 = arith.constant 0 : i32
    %0 = arith.cmpi eq, %arg1, %c0_i32 : i32
    %1 = arith.extui %0 : i1 to i32
    %c0_i32_0 = arith.constant 0 : i32
    %2 = arith.cmpi ne, %1, %c0_i32_0 : i32
    scf.if %2 {
      %cst_17 = arith.constant 0.000000e+00 : f32
      %19 = vector.broadcast %cst_17 : f32 to vector<1x32xf32>
      %c0_18 = arith.constant 0 : index
      %c0_19 = arith.constant 0 : index
      %20 = vector.load %arg5[%c0_18, %c0_19] : memref<1x32xf32, #tpu.memory_space<vmem>>, vector<1x32xf32>
      tpu.vector_store %arg5[%c0_18, %c0_19], %19 {strides = array<i32>} : memref<1x32xf32, #tpu.memory_space<vmem>>, vector<1x32xf32>,
      %cst_20 = arith.constant 0.000000e+00 : f32
      %21 = vector.broadcast %cst_20 : f32 to vector<1x1xf32>
      %c0_21 = arith.constant 0 : index
      %c0_22 = arith.constant 0 : index
      %22 = vector.load %arg6[%c0_21, %c0_22] : memref<1x1xf32, #tpu.memory_space<vmem>>, vector<1x1xf32>
      tpu.vector_store %arg6[%c0_21, %c0_22], %21 {strides = array<i32>} : memref<1x1xf32, #tpu.memory_space<vmem>>, vector<1x1xf32>,
    } else {
    }
    %c0 = arith.constant 0 : index
    %c0_1 = arith.constant 0 : index
    %c0_2 = arith.constant 0 : index
    %3 = vector.load %arg2[%c0, %c0_1, %c0_2] : memref<1x8x32xf32, #tpu.memory_space<vmem>>, vector<1x8x32xf32>
    %4 = vector.shape_cast %3 : vector<1x8x32xf32> to vector<8x32xf32>
    %c0_3 = arith.constant 0 : index
    %c0_4 = arith.constant 0 : index
    %c0_5 = arith.constant 0 : index
    %5 = vector.load %arg3[%c0_3, %c0_4, %c0_5] : memref<1x1x8xf32, #tpu.memory_space<vmem>>, vector<1x1x8xf32>
    %6 = vector.shape_cast %5 : vector<1x1x8xf32> to vector<1x8xf32>
    %c0_6 = arith.constant 0 : index
    %c0_7 = arith.constant 0 : index
    %7 = vector.load %arg5[%c0_6, %c0_7] : memref<1x32xf32, #tpu.memory_space<vmem>>, vector<1x32xf32>
    %cst = arith.constant dense<0.000000e+00> : vector<1x32xf32>
    %8 = tpu.matmul %6, %4, %cst {dimension_numbers = #tpu.dot_dimension_numbers<[1], [0], [0], [1], [0, 0, 1, 1], [], []>} : vector<1x8xf32>, vector<8x32xf32>, vector<1x32xf32> -> vector<1x32xf32>
    %9 = arith.addf %7, %8 : vector<1x32xf32>
    %c0_8 = arith.constant 0 : index
    %c0_9 = arith.constant 0 : index
    %10 = vector.load %arg5[%c0_8, %c0_9] : memref<1x32xf32, #tpu.memory_space<vmem>>, vector<1x32xf32>
    tpu.vector_store %arg5[%c0_8, %c0_9], %9 {strides = array<i32>} : memref<1x32xf32, #tpu.memory_space<vmem>>, vector<1x32xf32>,
    %c0_10 = arith.constant 0 : index
    %c0_11 = arith.constant 0 : index
    %11 = vector.load %arg6[%c0_10, %c0_11] : memref<1x1xf32, #tpu.memory_space<vmem>>, vector<1x1xf32>
    %cst_12 = arith.constant dense<0.000000e+00> : vector<1xf32>
    %12 = vector.multi_reduction <add>, %6, %cst_12 [1] : vector<1x8xf32> to vector<1xf32>
    %13 = vector.shape_cast %12 : vector<1xf32> to vector<1x1xf32>
    %14 = arith.addf %11, %13 : vector<1x1xf32>
    %c0_13 = arith.constant 0 : index
    %c0_14 = arith.constant 0 : index
    %15 = vector.load %arg6[%c0_13, %c0_14] : memref<1x1xf32, #tpu.memory_space<vmem>>, vector<1x1xf32>
    tpu.vector_store %arg6[%c0_13, %c0_14], %14 {strides = array<i32>} : memref<1x1xf32, #tpu.memory_space<vmem>>, vector<1x1xf32>,
    %c0_i32_15 = arith.constant 0 : i32
    %16 = arith.cmpi eq, %arg1, %c0_i32_15 : i32
    %17 = arith.extui %16 : i1 to i32
    %c0_i32_16 = arith.constant 0 : i32
    %18 = arith.cmpi ne, %17, %c0_i32_16 : i32
    scf.if %18 {
      %c0_17 = arith.constant 0 : index
      %c0_18 = arith.constant 0 : index
      %19 = vector.load %arg6[%c0_17, %c0_18] : memref<1x1xf32, #tpu.memory_space<vmem>>, vector<1x1xf32>
      %cst_19 = arith.constant 9.99999971E-10 : f32
      %20 = vector.broadcast %cst_19 : f32 to vector<1x1xf32>
      %21 = arith.maximumf %19, %20 : vector<1x1xf32>
      %c0_20 = arith.constant 0 : index
      %c0_21 = arith.constant 0 : index
      %22 = vector.load %arg5[%c0_20, %c0_21] : memref<1x32xf32, #tpu.memory_space<vmem>>, vector<1x32xf32>
      %23 = vector.broadcast %21 : vector<1x1xf32> to vector<1x32xf32>
      %24 = arith.divf %22, %23 : vector<1x32xf32>
      %25 = vector.shape_cast %24 : vector<1x32xf32> to vector<1x1x32xf32>
      %c0_22 = arith.constant 0 : index
      %c0_23 = arith.constant 0 : index
      %c0_24 = arith.constant 0 : index
      %26 = vector.load %arg4[%c0_22, %c0_23, %c0_24] : memref<1x1x32xf32, #tpu.memory_space<vmem>>, vector<1x1x32xf32>
      tpu.vector_store %arg4[%c0_22, %c0_23, %c0_24], %25 {strides = array<i32>} : memref<1x1x32xf32, #tpu.memory_space<vmem>>, vector<1x1x32xf32>,
    } else {
    }
    return
  }
  func.func @transform_0(%arg0: i32, %arg1: i32) -> (i32, i32, i32) {
    %c0_i32 = arith.constant 0 : i32
    %c0_i32_0 = arith.constant 0 : i32
    return %arg0, %arg1, %c0_i32 : i32, i32, i32
  }
  func.func @transform_1(%arg0: i32, %arg1: i32) -> (i32, i32, i32) {
    %c0_i32 = arith.constant 0 : i32
    %c0_i32_0 = arith.constant 0 : i32
    return %arg0, %c0_i32, %arg1 : i32, i32, i32
  }
  func.func @transform_2(%arg0: i32, %arg1: i32) -> (i32, i32, i32) {
    %c0_i32 = arith.constant 0 : i32
    %c0_i32_0 = arith.constant 0 : i32
    %c0_i32_1 = arith.constant 0 : i32
    return %arg0, %c0_i32, %c0_i32_0 : i32, i32, i32
  }
}

</mosaic_0001>

<llo_original>
// kernel: tpu_custom_call.1
$region0: #{tpu_custom_call.1}
  #allocation0 [shape = 'u32[]', space=smem, size = 0x4, offset = 0x4, fixed_abs, tag = 'smem constant byte address 0x4 - core index']
  #allocation1 [shape = 'u32[144,128]{1,0:T(1,128)}', space=vmem, size = 0x12000, scoped, tag = 'internal scratch']
  #allocation2 [shape = 'f32[1,32]{1,0:T(1,128)}', space=vmem, size = 0x200, scoped, tag = 'scratch operand']
  #allocation3 [shape = 'f32[1,1]{1,0:T(1,128)}', space=vmem, size = 0x200, scoped, tag = 'scratch operand']
  %s0 = inlined_call_operand.hbm [shape: f32[6,8,32], index: 0, kind: input, shape index: {}]
  %s1 = inlined_call_operand.hbm [shape: f32[6,1,8], index: 1, kind: input, shape index: {}]
  %s2 = inlined_call_operand.hbm [shape: f32[6,1,32], index: 2, kind: output, shape index: {}]
  %s3 = sld [smem:[#allocation0]]
  $region57: #{tpu_custom_call.1} parent=0
    _
  %s5 = ssub.s32 1, %s3
  %s6 = scalar_select 0, %s5, %s3
  $region1: #{tpu_custom_call.1} parent=0
    #allocation4 [shape = 'u8[8192]{0}', space=vmem, size = 0x2000, scoped, tag = 'input window, operand 0']
    #allocation5 [shape = 's32[2]{0}', space=sflag, size = 0x8, scoped, tag = 'scoped memory for tpu_custom_call.1']
    #allocation6 [shape = 's32[2]{0}', space=sflag, size = 0x8, scoped, tag = 'scoped memory for tpu_custom_call.1']
    #allocation7 [shape = 'u8[1024]{0}', space=vmem, size = 0x400, scoped, tag = 'input window, operand 1']
    #allocation8 [shape = 's32[2]{0}', space=sflag, size = 0x8, scoped, tag = 'scoped memory for tpu_custom_call.1']
    #allocation9 [shape = 'u8[1024]{0}', space=vmem, size = 0x400, scoped, tag = 'output window, operand 0']
    %7 = vsyncpa [#allocation5], 0
    %s8 = scalar_lea.sflag [#allocation5], 1
    %9 = vsyncpa %s8, 0
    %10 = vsyncpa [#allocation8], 0
    %s11 = scalar_lea.sflag [#allocation8], 1
    %12 = vsyncpa %s11, 0
    %13 = vsyncpa [#allocation6], 0
    %s14 = scalar_lea.sflag [#allocation6], 1
    %15 = vsyncpa %s14, 0
    loop: start=0, step=1, limit=8
    $region2: #{tpu_custom_call.1} parent=1 // loop_pre_header
      _
    $region3: #{tpu_custom_call.1} parent=1 // loop_header
      %s17 = sphi 0, %s21
      %p18 = scmp.ge.s32.totalorder %s17, 8
      %s24 = sphi 0, %s36
      %s25 = sphi 0, %s32
      %s26 = sphi 0, %s24
      %s27 = sphi 0, %s25
      %s28 = sphi 0, %s26
      %s29 = sphi 0, %s27
      %s41 = sphi 0, %s43
      %s44 = sphi 0, %s41
      %s45 = sphi 0, %s44
      %s61 = sphi 0, %s45
      %s69 = sphi 0, %s71
      %s72 = sphi 0, %s69
      %s73 = sphi 0, %s72
      %s89 = sphi 0, %s73
      %s95 = sphi 0, %s97
      %s98 = sphi 0, %s95
      %s99 = sphi 0, %s98
      %s115 = sphi 0, %s99
    $region4: #{tpu_custom_call.1} parent=1 // loop_header_branch
      %20 = sbr.rel (%p18) target = $region8
    $region5: #{tpu_custom_call.1} parent=1 // loop_body
      %s22 = ssub.s32 %s17, 1
      %s23 = ssub.s32 %s17, 2
      %s30 = sadd.s32 1, %s25
      %p31 = scmp.ge.s32.totalorder %s30, 1
      %s32 = scalar_select %p31, 0, %s30
      %s33 = sadd.s32 1, %s24
      %s34 = scalar_select %p31, %s33, %s24
      %p35 = scmp.ge.s32.totalorder %s34, 6
      %s36 = scalar_select %p35, 0, %s34
      %s37 = ssub.s32 %s24, %s36
      %s38 = ssub.s32 %s25, %s32
      %s39 = sor.u32 %s37, %s38
      %p40 = scmp.eq.s32.totalorder %s39, 0
      %s42 = sadd.s32 %s41, 1
      %s43 = scalar_select %p40, %s41, %s42
      %p46 = pneg %p40
      %p47 = scmp.eq.s32.totalorder %s17, 5
      %p48 = por %p46, %p47
      %p49 = scmp.ne.s32.totalorder %s41, %s44
      %p50 = scmp.eq.s32.totalorder %s17, 0
      %p51 = por %p49, %p50
      %p52 = scmp.ne.s32.totalorder %s41, %s44
      %p53 = scmp.eq.s32.totalorder %s22, 5
      %p54 = por %p52, %p53
      %p55 = scmp.ne.s32.totalorder %s44, %s45
      %p56 = scmp.eq.s32.totalorder %s22, 0
      %p57 = por %p55, %p56
      %p58 = scmp.ne.s32.totalorder %s44, %s45
      %p59 = scmp.eq.s32.totalorder %s23, 5
      %p60 = por %p58, %p59
      %p62 = scmp.ne.s32.totalorder %s45, %s61
      %p63 = scmp.eq.s32.totalorder %s23, 0
      %p64 = por %p62, %p63
      %s65 = ssub.s32 %s24, %s36
      %s66 = ssub.s32 %s25, %s32
      %s67 = sor.u32 %s65, %s66
      %p68 = scmp.eq.s32.totalorder %s67, 0
      %s70 = sadd.s32 %s69, 1
      %s71 = scalar_select %p68, %s69, %s70
      %p74 = pneg %p68
      %p75 = scmp.eq.s32.totalorder %s17, 5
      %p76 = por %p74, %p75
      %p77 = scmp.ne.s32.totalorder %s69, %s72
      %p78 = scmp.eq.s32.totalorder %s17, 0
      %p79 = por %p77, %p78
      %p80 = scmp.ne.s32.totalorder %s69, %s72
      %p81 = scmp.eq.s32.totalorder %s22, 5
      %p82 = por %p80, %p81
      %p83 = scmp.ne.s32.totalorder %s72, %s73
      %p84 = scmp.eq.s32.totalorder %s22, 0
      %p85 = por %p83, %p84
      %p86 = scmp.ne.s32.totalorder %s72, %s73
      %p87 = scmp.eq.s32.totalorder %s23, 5
      %p88 = por %p86, %p87
      %p90 = scmp.ne.s32.totalorder %s73, %s89
      %p91 = scmp.eq.s32.totalorder %s23, 0
      %p92 = por %p90, %p91
      %s93 = ssub.s32 %s24, %s36
      %p94 = scmp.eq.s32.totalorder %s93, 0
      %s96 = sadd.s32 %s95, 1
      %s97 = scalar_select %p94, %s95, %s96
      %p100 = pneg %p94
      %p101 = scmp.eq.s32.totalorder %s17, 5
      %p102 = por %p100, %p101
      %p103 = scmp.ne.s32.totalorder %s95, %s98
      %p104 = scmp.eq.s32.totalorder %s17, 0
      %p105 = por %p103, %p104
      %p106 = scmp.ne.s32.totalorder %s95, %s98
      %p107 = scmp.eq.s32.totalorder %s22, 5
      %p108 = por %p106, %p107
      %p109 = scmp.ne.s32.totalorder %s98, %s99
      %p110 = scmp.eq.s32.totalorder %s22, 0
      %p111 = por %p109, %p110
      %p112 = scmp.ne.s32.totalorder %s98, %s99
      %p113 = scmp.eq.s32.totalorder %s23, 5
      %p114 = por %p112, %p113
      %p116 = scmp.ne.s32.totalorder %s99, %s115
      %p117 = scmp.eq.s32.totalorder %s23, 0
      %p118 = por %p116, %p117
      %p119 = scmp.le.s32.totalorder 1, %s17
      %p120 = scmp.lt.s32.totalorder %s17, 7
      %p121 = pnand %p119, %p120
      %p122 = pneg %p121
      // Predicated region
      $region9: #{tpu_custom_call.1} parent=5 // pred_check
        _
      $region10: #{tpu_custom_call.1} parent=5 // pred_check_branch
        %124 = sbr.rel (%p121) target = $region12
      $region11: #{tpu_custom_call.1} parent=5 // pred_region
        %s125 = ssub.s32 %s17, 1
      $region12: #{tpu_custom_call.1} parent=5 // pred_fallthru
        _
      %p126 = scmp.lt.s32.totalorder %s17, 6
      // Predicated region
      $region13: #{tpu_custom_call.1} parent=5 // pred_check
        %p127 = pneg %p126
      $region14: #{tpu_custom_call.1} parent=5 // pred_check_branch
        %129 = sbr.rel (%p127) target = $region16
      $region15: #{tpu_custom_call.1} parent=5 // pred_region
        // Predicated region
        $region17: #{tpu_custom_call.1} parent=15 // pred_check
          %p130 = pneg %p51
        $region18: #{tpu_custom_call.1} parent=15 // pred_check_branch
          %132 = sbr.rel (%p130) target = $region20
        $region19: #{tpu_custom_call.1} parent=15 // pred_region
          %s133 = sand.u32 %s41, 1
          %s134 = scalar_lea.sflag [#allocation5], %s133
          %s135 = sand.u32 %s41, 1
          %s136 = smul.addr %s135, 8
          %s137 = scalar_lea.vmem [#allocation4], %s136
          %s139 = ssub.s32 128, 128
          %140 = vsyncadd %s134, %s139
          %s141 = sadd.s32 %s25, %s24
          %s142 = smul.addr %s141, 128
          %s143 = scalar_lea.hbm %s0, %s142
          %s145 = sshll.u32 %s137, 4
          %s146 = int_to_ptr.vmem [resolvable:$true] %s145
          %148 = dma.hbm_to_vmem [thread:$0]  %s143, 128, %s146, %s134
        $region20: #{tpu_custom_call.1} parent=15 // pred_fallthru
          _
        // Predicated region
        $region21: #{tpu_custom_call.1} parent=15 // pred_check
          %p149 = pneg %p79
        $region22: #{tpu_custom_call.1} parent=15 // pred_check_branch
          %151 = sbr.rel (%p149) target = $region24
        $region23: #{tpu_custom_call.1} parent=15 // pred_region
          %s152 = sand.u32 %s69, 1
          %s153 = scalar_lea.sflag [#allocation8], %s152
          %s154 = sand.u32 %s69, 1
          %s155 = scalar_lea.vmem [#allocation7], %s154
          %s157 = ssub.s32 16, 16
          %158 = vsyncadd %s153, %s157
          %s159 = sadd.s32 %s25, %s24
          %s160 = smul.addr %s159, 16
          %s161 = scalar_lea.hbm %s1, %s160
          %s163 = sshll.u32 %s155, 4
          %s164 = int_to_ptr.vmem [resolvable:$true] %s163
          %166 = dma.hbm_to_vmem [thread:$0]  %s161, 16, %s164, %s153
        $region24: #{tpu_custom_call.1} parent=15 // pred_fallthru
          _
      $region16: #{tpu_custom_call.1} parent=5 // pred_fallthru
        _
      %p167 = scmp.le.s32.totalorder 1, %s17
      %p168 = scmp.lt.s32.totalorder %s17, 7
      %p169 = pnand %p167, %p168
      %p170 = pneg %p169
      // Predicated region
      $region25: #{tpu_custom_call.1} parent=5 // pred_check
        _
      $region26: #{tpu_custom_call.1} parent=5 // pred_check_branch
        %172 = sbr.rel (%p169) target = $region28
      $region27: #{tpu_custom_call.1} parent=5 // pred_region
        %s173 = ssub.s32 %s17, 1
        %s174 = sand.u32 %s44, 1
        %s175 = scalar_lea.sflag [#allocation5], %s174
        %s176 = sand.u32 %s44, 1
        %s177 = smul.addr %s176, 8
        %s178 = scalar_lea.vmem [#allocation4], %s177
        // Predicated region
        $region29: #{tpu_custom_call.1} parent=27 // pred_check
          %p179 = pneg %p57
        $region30: #{tpu_custom_call.1} parent=27 // pred_check_branch
          %181 = sbr.rel (%p179) target = $region32
        $region31: #{tpu_custom_call.1} parent=27 // pred_region
          %182 = dma.done %s175, 128
        $region32: #{tpu_custom_call.1} parent=27 // pred_fallthru
          _
        %s183 = sand.u32 %s72, 1
        %s184 = scalar_lea.sflag [#allocation8], %s183
        %s185 = sand.u32 %s72, 1
        %s186 = scalar_lea.vmem [#allocation7], %s185
        // Predicated region
        $region33: #{tpu_custom_call.1} parent=27 // pred_check
          %p187 = pneg %p85
        $region34: #{tpu_custom_call.1} parent=27 // pred_check_branch
          %189 = sbr.rel (%p187) target = $region36
        $region35: #{tpu_custom_call.1} parent=27 // pred_region
          %190 = dma.done %s184, 16
        $region36: #{tpu_custom_call.1} parent=27 // pred_fallthru
          _
        %s191 = sand.u32 %s44, 1
        %s192 = scalar_lea.sflag [#allocation5], %s191
        %s193 = sand.u32 %s44, 1
        %s194 = smul.addr %s193, 8
        %s195 = scalar_lea.vmem [#allocation4], %s194
        %p196 = pneg %p57
        %p197 = pneg %p54
        %s198 = sand.u32 %s72, 1
        %s199 = scalar_lea.sflag [#allocation8], %s198
        %s200 = sand.u32 %s72, 1
        %s201 = scalar_lea.vmem [#allocation7], %s200
        %p202 = pneg %p85
        %p203 = pneg %p82
        %p204 = pneg %p111
        %p205 = pneg %p108
        %s206 = sand.u32 %s98, 1
        %s207 = scalar_lea.sflag [#allocation6], %s206
        %s208 = sand.u32 %s98, 1
        %s209 = scalar_lea.vmem [#allocation9], %s208
        %p210 = scmp.eq.s32.totalorder %s27, 0
        // Predicated region
        $region37: #{tpu_custom_call.1} parent=27 // pred_check
          %p211 = pneg %p210
        $region38: #{tpu_custom_call.1} parent=27 // pred_check_branch
          %213 = sbr.rel (%p211) target = $region40
        $region39: #{tpu_custom_call.1} parent=27 // pred_region
          %vm214 = vcmask 253952
          %215 = vst.msk [vmem:[#allocation2] sm:$0x1] %vm214, 0.0
          %vm216 = vcmask 0
          %217 = vst.msk [vmem:[#allocation3] sm:$0x1] %vm216, 0.0
        $region40: #{tpu_custom_call.1} parent=27 // pred_fallthru
          _
        %v218 = vld [vmem:[%s178] sm:$0xff]
        %v219 = vld [vmem:[%s186] sm:$0x1]
        %v220 = vld [vmem:[#allocation2] sm:$0x1]
        %vm221 = vcmask 64512
        %v223 = vsel %vm221, %v219, 0
        %225 = vmatprep.subr.mxu0 0.0
        %226 = vmatpush1.msra.mxu0 0.0
        %227 = vmatprep.subr.mxu0 0.0
        %228 = vmatpush1.msra.mxu0 0.0
        %229 = vmatprep.subr.mxu0 0.0
        %230 = vmatpush1.msra.mxu0 0.0
        %231 = vmatprep.subr.mxu0 0.0
        %232 = vmatpush1.msra.mxu0 0.0
        %233 = vmatprep.subr.mxu0 0.0
        %234 = vmatpush1.msra.mxu0 0.0
        %235 = vmatprep.subr.mxu0 0.0
        %236 = vmatpush1.msra.mxu0 0.0
        %237 = vmatprep.subr.mxu0 0.0
        %238 = vmatpush1.msra.mxu0 0.0
        %239 = vmatprep.subr.mxu0 0.0
        %240 = vmatpush1.msra.mxu0 0.0
        %241 = vmatprep.subr.mxu0 0.0
        %242 = vmatpush1.msra.mxu0 0.0
        %243 = vmatprep.subr.mxu0 0.0
        %244 = vmatpush1.msra.mxu0 0.0
        %245 = vmatprep.subr.mxu0 0.0
        %246 = vmatpush1.msra.mxu0 0.0
        %247 = vmatprep.subr.mxu0 0.0
        %248 = vmatpush1.msra.mxu0 0.0
        %249 = vmatprep.subr.mxu0 0.0
        %250 = vmatpush1.msra.mxu0 0.0
        %251 = vmatprep.subr.mxu0 0.0
        %252 = vmatpush1.msra.mxu0 0.0
        %253 = vmatprep.subr.mxu0 0.0
        %254 = vmatpush1.msra.mxu0 0.0
        %255 = vmatprep.subr.mxu0 0.0
        %256 = vmatpush1.msra.mxu0 %v218
        %257 = vmatprep.subr.mxu0 0.0
        %258 = vmatpush2.msra.mxu0 0.0
        %259 = vmatprep.subr.mxu0 0.0
        %260 = vmatpush2.msra.mxu0 0.0
        %261 = vmatprep.subr.mxu0 0.0
        %262 = vmatpush2.msra.mxu0 0.0
        %263 = vmatprep.subr.mxu0 0.0
        %264 = vmatpush2.msra.mxu0 0.0
        %265 = vmatprep.subr.mxu0 0.0
        %266 = vmatpush2.msra.mxu0 0.0
        %267 = vmatprep.subr.mxu0 0.0
        %268 = vmatpush2.msra.mxu0 0.0
        %269 = vmatprep.subr.mxu0 0.0
        %270 = vmatpush2.msra.mxu0 0.0
        %271 = vmatprep.subr.mxu0 0.0
        %272 = vmatpush2.msra.mxu0 0.0
        %273 = vmatprep.subr.mxu0 0.0
        %274 = vmatpush2.msra.mxu0 0.0
        %275 = vmatprep.subr.mxu0 0.0
        %276 = vmatpush2.msra.mxu0 0.0
        %277 = vmatprep.subr.mxu0 0.0
        %278 = vmatpush2.msra.mxu0 0.0
        %279 = vmatprep.subr.mxu0 0.0
        %280 = vmatpush2.msra.mxu0 0.0
        %281 = vmatprep.subr.mxu0 0.0
        %282 = vmatpush2.msra.mxu0 0.0
        %283 = vmatprep.subr.mxu0 0.0
        %284 = vmatpush2.msra.mxu0 0.0
        %285 = vmatprep.subr.mxu0 0.0
        %286 = vmatpush2.msra.mxu0 0.0
        %287 = vmatprep.subr.mxu0 0.0
        %288 = vmatpush2.msra.mxu0 0.0
        %289 = vmatprep.mubr.f32.mxu0 0.0
        %290 = vmatmul.mubr.f32.gmra.mxu0 %v223
        %v291 = vpop.f32.mrf.mxu0
        %v292 = vadd.f32 0.0, %v291
        %v293 = vpop.f32.mrf.mxu0
        %294 = vdwg.mxu0
        %v295 = vadd.f32 %v220, %v292
        %vm296 = vcmask 253952
        %297 = vst.msk [vmem:[#allocation2] sm:$0x1] %vm296, %v295
        %v298 = vld [vmem:[#allocation3] sm:$0x1]
        %vm299 = vcmask 57344
        %v300 = vsel %vm299, %v219, 0.0
        %301 = vadd.xlane.f32.xlu0 %v300
        %v302 = vpop.xlane.xlu0 %301
        %v303 = vadd.f32 %v298, %v302
        %vm304 = vcmask 0
        %305 = vst.msk [vmem:[#allocation3] sm:$0x1] %vm304, %v303
        // Predicated region
        $region41: #{tpu_custom_call.1} parent=27 // pred_check
          %p306 = pneg %p210
        $region42: #{tpu_custom_call.1} parent=27 // pred_check_branch
          %308 = sbr.rel (%p306) target = $region44
        $region43: #{tpu_custom_call.1} parent=27 // pred_region
          %v309 = vld [vmem:[#allocation3] sm:$0x1]
          %v310 = vmax.f32 %v309, 1e-09
          %v311 = vld [vmem:[#allocation2] sm:$0x1]
          %313 = vset.pattern.permute.xlu0 0
          %314 = vperm.xlu0 %313, %v310
          %v315 = vpop.permute.xlu0 %314
          %v317 = vlaneseq
          %v318 = vshrl.u32 %v317, 7
          %v319 = vsub.s32 0, %v318
          %v320 = vrot.slane %v315, %v319
          %v321 = vrcp.pop %v320
          %v322 = vmul.f32 %v311, %v321
          %323 = vst.msk [vmem:[%s209] sm:$0x1] %vm296, %v322
        $region44: #{tpu_custom_call.1} parent=27 // pred_fallthru
          _
        %s324 = sand.u32 %s98, 1
        %s325 = scalar_lea.sflag [#allocation6], %s324
        %s326 = sand.u32 %s98, 1
        %s327 = scalar_lea.vmem [#allocation9], %s326
        // Predicated region
        $region45: #{tpu_custom_call.1} parent=27 // pred_check
          %p328 = pneg %p108
        $region46: #{tpu_custom_call.1} parent=27 // pred_check_branch
          %330 = sbr.rel (%p328) target = $region48
        $region47: #{tpu_custom_call.1} parent=27 // pred_region
          %s332 = ssub.s32 16, 16
          %333 = vsyncadd %s325, %s332
          %s334 = smul.addr %s26, 16
          %s335 = scalar_lea.hbm %s2, %s334
          %s337 = sshll.u32 %s327, 4
          %s338 = int_to_ptr.vmem [resolvable:$true] %s337
          %340 = dma.vmem_to_hbm [thread:$0]  %s338, 16, %s335, %s325
        $region48: #{tpu_custom_call.1} parent=27 // pred_fallthru
          _
      $region28: #{tpu_custom_call.1} parent=5 // pred_fallthru
        _
      %p341 = scmp.le.s32.totalorder 2, %s17
      // Predicated region
      $region49: #{tpu_custom_call.1} parent=5 // pred_check
        %p342 = pneg %p341
      $region50: #{tpu_custom_call.1} parent=5 // pred_check_branch
        %344 = sbr.rel (%p342) target = $region52
      $region51: #{tpu_custom_call.1} parent=5 // pred_region
        %s345 = ssub.s32 %s17, 2
        // Predicated region
        $region53: #{tpu_custom_call.1} parent=51 // pred_check
          %p346 = pneg %p114
        $region54: #{tpu_custom_call.1} parent=51 // pred_check_branch
          %348 = sbr.rel (%p346) target = $region56
        $region55: #{tpu_custom_call.1} parent=51 // pred_region
          %s349 = sand.u32 %s99, 1
          %s350 = scalar_lea.sflag [#allocation6], %s349
          %s351 = sand.u32 %s99, 1
          %s352 = scalar_lea.vmem [#allocation9], %s351
          %353 = dma.done %s350, 16
        $region56: #{tpu_custom_call.1} parent=51 // pred_fallthru
          _
      $region52: #{tpu_custom_call.1} parent=5 // pred_fallthru
        _
    $region6: #{tpu_custom_call.1} parent=1 // loop_footer
      %s21 = sadd.s32 1, %s17
    $region7: #{tpu_custom_call.1} parent=1 // loop_footer_branch
      %16 = sbr.rel target = $region3
    $region8: #{tpu_custom_call.1} parent=1 // loop_exit
      _
    %354 = vsyncpa [#allocation5], 1
    %s355 = scalar_lea.sflag [#allocation5], 1
    %356 = vsyncpa %s355, 1
    %357 = vsyncpa [#allocation8], 1
    %s358 = scalar_lea.sflag [#allocation8], 1
    %359 = vsyncpa %s358, 1
    %360 = vsyncpa [#allocation6], 1
    %s361 = scalar_lea.sflag [#allocation6], 1
    %362 = vsyncpa %s361, 1

</llo_original>
